<compile_context>
chip_gen: v7x
topology: tpu7x:2x2x1
jax: 0.10.0
libtpu: 0.0.40
codegen_flags: <defaults>
</compile_context>

<pallas_src>
import jax
import jax.numpy as jnp
from jax.experimental import pallas as pl
from jax.experimental.pallas import tpu as pltpu


# --------------------------------------------------------------------------- #
# Kernel
# --------------------------------------------------------------------------- #
def _mlp_kernel(x_ref, w1_ref, b1_ref, w2_ref, b2_ref, o_ref):
    # Cast x to the compute dtype in VMEM (free on this HBM-bound kernel),
    # keeping the HBM read at the caller's dtype.
    x = x_ref[...].astype(w1_ref.dtype)
    # First linear (MXU) + bias + ReLU on the f32 accumulator (VPU).
    h = jnp.dot(x, w1_ref[...], preferred_element_type=jnp.float32)
    h = jnp.maximum(h + b1_ref[...], 0.0)            # b1 is (1, pack*hidden)
    # Second linear (MXU) + bias.
    out = jnp.dot(h.astype(w2_ref.dtype), w2_ref[...],
                  preferred_element_type=jnp.float32)
    o_ref[...] = (out + b2_ref[...]).astype(o_ref.dtype)


# --------------------------------------------------------------------------- #
# Helpers
# --------------------------------------------------------------------------- #
def _device_kind():
    try:
        return jax.devices()[0].device_kind.lower()
    except Exception:  # pragma: no cover - defensive (e.g. no device yet)
        return ""


def _round_up(x, m):
    return ((x + m - 1) // m) * m


def choose_pack(in_dim, hidden, out_dim, *, compute_dtype=jnp.bfloat16,
                vmem_budget=96 << 20, max_pack=None):
    """Pick the row-packing factor (lane density vs. kron FLOP/VMEM inflation)."""
    if max_pack is None:
        kind = _device_kind()
        # kron inflates MXU FLOPs by `pack`x; stay under the MXU/HBM ridge on
        # v5e (197 TF/s) and v7x (~996 TF/s per TC vs 3.2 TB/s).  v6e takes 16.
        max_pack = 8 if ("v5" in kind or "v7" in kind or "7x" in kind) else 16
    if out_dim >= 128:
        return 1
    pack = max(1, min(128 // out_dim, max_pack))
    cdt = jnp.dtype(compute_dtype) if compute_dtype is not None else jnp.dtype(jnp.float32)
    cbytes = cdt.itemsize
    # VMEM guard: kron'd weights scale as pack^2; keep them (conservatively
    # counted double-buffered) under half the budget, leaving room for the
    # x/out tiles and the f32 intermediate.
    while pack > 1:
        w_bytes = 2 * cbytes * (pack * in_dim * pack * hidden
                                + pack * hidden * pack * out_dim)
        if w_bytes <= vmem_budget // 2:
            break
        pack //= 2
    return max(pack, 1)


def prepare_edge_mlp_params(w1, b1, w2, b2, *, pack, compute_dtype=jnp.bfloat16):
    """Block-diagonal (kron) weights + tiled biases.  Call ONCE per parameter
    set and reuse across edge_feature_mlp2_apply calls (hoists the prep out of
    the per-call path)."""
    w1_t = w1.T.astype(jnp.float32)                   # (in, hidden)
    w2_t = w2.T.astype(jnp.float32)                   # (hidden, out)
    eye = jnp.eye(pack, dtype=jnp.float32)
    w1_bd = jnp.kron(eye, w1_t)                       # (pack*in, pack*hidden)
    w2_bd = jnp.kron(eye, w2_t)                       # (pack*hidden, pack*out)
    b1_bd = jnp.tile(b1.astype(jnp.float32), pack).reshape(1, -1)
    b2_bd = jnp.tile(b2.astype(jnp.float32), pack).reshape(1, -1)
    if compute_dtype is not None:
        w1_bd = w1_bd.astype(compute_dtype)
        w2_bd = w2_bd.astype(compute_dtype)
    # Biases stay f32: added to the f32 MXU accumulator in-kernel.
    return w1_bd, b1_bd, w2_bd, b2_bd


# --------------------------------------------------------------------------- #
# Apply (pallas_call wrapper)
# --------------------------------------------------------------------------- #
def edge_feature_mlp2_apply(x, w1_bd, b1_bd, w2_bd, b2_bd, *, pack,
                            out_dtype=None, tile_n=None,
                            vmem_budget=None, num_tc=None):
    N, in_dim = x.shape
    pin, phid = w1_bd.shape
    pout = w2_bd.shape[1]
    assert pin == pack * in_dim, "prepared weights do not match x / pack"
    out_dim = pout // pack
    out_dtype = jnp.dtype(out_dtype) if out_dtype is not None else jnp.dtype(x.dtype)

    kind = _device_kind()
    if num_tc is None:
        num_tc = 2 if ("v7" in kind or "7x" in kind) else 1
    if vmem_budget is None:
        vmem_budget = (40 << 20) if num_tc == 2 else (96 << 20)

    cbytes = jnp.dtype(w1_bd.dtype).itemsize
    xbytes = jnp.dtype(x.dtype).itemsize
    obytes = out_dtype.itemsize

    # Sublane alignment: 8 rows for 32-bit tiles, 16 for 16-bit (bf16) tiles.
    sublane = max(8, 32 // xbytes, 32 // obytes)
    row_align = sublane * pack

    n_pad = _round_up(N, row_align)          # minimal pad: < row_align extra rows

    if tile_n is None:
        tile_n = 32768                        # big tile: amortize ~0.35us/step
    tile_n = max(row_align, (tile_n // row_align) * row_align)
    tile_n = min(tile_n, n_pad)

    def vmem_est(t):
        tr = t // pack
        return (2 * tr * pin * xbytes                      # x tile (double buffered)
                + 2 * tr * pout * obytes                   # out tile (double buffered)
                + 2 * tr * phid * 4                        # f32 intermediate h (+slack)
                + 2 * (pin * phid + phid * pout) * cbytes  # resident weights (2x, conservative)
                + 2 * (phid + pout) * 4)                   # biases

    # Shrink the tile until it fits the VMEM budget.
    while tile_n > row_align and vmem_est(tile_n) > vmem_budget:
        tile_n = max(row_align, ((tile_n // 2) // row_align) * row_align)
    # v7x only: two TensorCores share the "parallel" grid axis -> >=2 steps.
    while num_tc > 1 and tile_n > row_align and pl.cdiv(n_pad, tile_n) < num_tc:
        tile_n = max(row_align, ((tile_n // 2) // row_align) * row_align)

    if n_pad != N:
        # Minimal zero-pad so the pack-reshape is legal; the ragged last grid
        # block is handled by Pallas (no padding to grid_len * tile_n).
        x = jnp.pad(x, ((0, n_pad - N), (0, 0)))
    x_p = x.reshape(n_pad // pack, pin)       # row-major reshape: free (bitcast)

    tile_rows = tile_n // pack
    n_rows = n_pad // pack
    grid_len = pl.cdiv(n_rows, tile_rows)

    vmem_limit = int(min(max(vmem_est(tile_n) * 3 // 2 + (4 << 20), 32 << 20),
                         (48 << 20) if num_tc == 2 else (120 << 20)))

    out_packed = pl.pallas_call(
        _mlp_kernel,
        out_shape=jax.ShapeDtypeStruct((n_rows, pout), out_dtype),
        grid_spec=pltpu.PrefetchScalarGridSpec(
            num_scalar_prefetch=0,
            grid=(grid_len,),
            in_specs=[
                pl.BlockSpec((tile_rows, pin), lambda i: (i, 0)),   # x tile
                pl.BlockSpec((pin, phid), lambda i: (0, 0)),        # W1 (resident)
                pl.BlockSpec((1, phid), lambda i: (0, 0)),          # b1
                pl.BlockSpec((phid, pout), lambda i: (0, 0)),       # W2 (resident)
                pl.BlockSpec((1, pout), lambda i: (0, 0)),          # b2
            ],
            out_specs=pl.BlockSpec((tile_rows, pout), lambda i: (i, 0)),
        ),
        compiler_params=pltpu.CompilerParams(
            dimension_semantics=("parallel",),
            vmem_limit_bytes=vmem_limit,
        ),
    )(x_p, w1_bd, b1_bd, w2_bd, b2_bd)

    out = out_packed.reshape(n_pad, out_dim)
    return out[:N] if n_pad != N else out


# --------------------------------------------------------------------------- #
# Convenience wrapper (choose pack, prepare weights, apply)
# --------------------------------------------------------------------------- #
def edge_feature_mlp2(x, w1, b1, w2, b2, *, compute_dtype=jnp.bfloat16,
                      out_dtype=None, tile_n=None, pack=None):
    """x: [N, in_dim]; w1: [hidden, in_dim]; b1: [hidden];
       w2: [out, hidden];  b2: [out]  (torch.nn.Linear layout).

    compute_dtype=jnp.bfloat16 (default): bf16 weights + in-kernel bf16 x cast,
    f32 accumulation/biases.  compute_dtype=None: full-f32 debug path.
    For repeated inference, call prepare_edge_mlp_params once and use
    edge_feature_mlp2_apply directly (or jit this wrapper)."""
    _, in_dim = x.shape
    hidden = w1.shape[0]
    out_dim = w2.shape[0]

    kind = _device_kind()
    num_tc = 2 if ("v7" in kind or "7x" in kind) else 1
    vmem_budget = (40 << 20) if num_tc == 2 else (96 << 20)

    if pack is None:
        pack = choose_pack(in_dim, hidden, out_dim,
                           compute_dtype=compute_dtype, vmem_budget=vmem_budget)
    params = prepare_edge_mlp_params(w1, b1, w2, b2, pack=pack,
                                     compute_dtype=compute_dtype)
    return edge_feature_mlp2_apply(x, *params, pack=pack, out_dtype=out_dtype,
                                   tile_n=tile_n, vmem_budget=vmem_budget,
                                   num_tc=num_tc)


def reference_mlp(x, w1, b1, w2, b2):
    h = jnp.maximum(x @ w1.T + b1, 0.0)
    return h @ w2.T + b2


# --------------------------------------------------------------------------- #
# Self-test
# --------------------------------------------------------------------------- #
if __name__ == "__main__":
    # Small, module-consistent shapes; N deliberately NOT tile/pack aligned so
    # the minimal-pad + ragged-last-block path is exercised.
    N, input_dim, hidden_dim, output_dim = 1000, 16, 32, 8

    key = jax.random.PRNGKey(0)
    kx, kw1, kb1, kw2, kb2 = jax.random.split(key, 5)

    x = jax.random.normal(kx, (N, input_dim), dtype=jnp.float32)

    # Deterministic parameter init (uniform, like torch.nn.Linear's default range).
    bound1 = 1.0 / (input_dim ** 0.5)
    bound2 = 1.0 / (hidden_dim ** 0.5)
    w1 = jax.random.uniform(kw1, (hidden_dim, input_dim), jnp.float32, -bound1, bound1)
    b1 = jax.random.uniform(kb1, (hidden_dim,), jnp.float32, -bound1, bound1)
    w2 = jax.random.uniform(kw2, (output_dim, hidden_dim), jnp.float32, -bound2, bound2)
    b2 = jax.random.uniform(kb2, (output_dim,), jnp.float32, -bound2, bound2)

    ref = jax.block_until_ready(reference_mlp(x, w1, b1, w2, b2))

    # f32 debug path: should match the reference closely.
    out_f32 = jax.block_until_ready(
        edge_feature_mlp2(x, w1, b1, w2, b2, compute_dtype=None))
    assert out_f32.shape == (N, output_dim)
    assert jnp.allclose(out_f32, ref, atol=1e-4, rtol=1e-4), "f32 mismatch vs. reference"

    # Default path: bf16 weights / in-kernel bf16 x, f32 accumulation.
    out_bf16 = jax.block_until_ready(edge_feature_mlp2(x, w1, b1, w2, b2))
    assert out_bf16.shape == (N, output_dim)
    assert jnp.allclose(out_bf16, ref, atol=5e-2, rtol=5e-2), "bf16 mismatch vs. reference"

    # Prepared-params path (weight prep hoisted out of the per-call path).
    pack = choose_pack(input_dim, hidden_dim, output_dim,
                       compute_dtype=jnp.bfloat16, vmem_budget=96 << 20)
    params = prepare_edge_mlp_params(w1, b1, w2, b2, pack=pack,
                                     compute_dtype=jnp.bfloat16)
    out_prep = jax.block_until_ready(
        edge_feature_mlp2_apply(x, *params, pack=pack))
    assert out_prep.shape == (N, output_dim)
    assert jnp.allclose(out_prep, ref, atol=5e-2, rtol=5e-2), "prepared-path mismatch"

    print("KERNEL_OK")
</pallas_src>

<mosaic_0001>
module attributes {stable_mosaic.version = 11 : i64} {
  func.func @_mlp_kernel(%arg0: i32, %arg1: memref<64x256xf32, #tpu.memory_space<vmem>>, %arg2: memref<256x512xf32, #tpu.memory_space<vmem>>, %arg3: memref<1x512xf32, #tpu.memory_space<vmem>>, %arg4: memref<512x128xf32, #tpu.memory_space<vmem>>, %arg5: memref<1x128xf32, #tpu.memory_space<vmem>>, %arg6: memref<64x128xf32, #tpu.memory_space<vmem>>) attributes {dimension_semantics = [#tpu.dimension_semantics<parallel>], iteration_bounds = array<i64: 1>, scalar_prefetch = 0 : i64, scratch_operands = 0 : i64, tpu.core_type = #tpu.core_type<tc>, window_params = [{transform_indices = @transform_0, window_bounds = array<i64: 64, 256>}, {pipeline_mode = #tpu.pipeline_mode<synchronous>, transform_indices = @transform_1, window_bounds = array<i64: 256, 512>}, {pipeline_mode = #tpu.pipeline_mode<synchronous>, transform_indices = @transform_2, window_bounds = array<i64: 1, 512>}, {pipeline_mode = #tpu.pipeline_mode<synchronous>, transform_indices = @transform_3, window_bounds = array<i64: 512, 128>}, {pipeline_mode = #tpu.pipeline_mode<synchronous>, transform_indices = @transform_4, window_bounds = array<i64: 1, 128>}, {transform_indices = @transform_5, window_bounds = array<i64: 64, 128>}]} {
    %c0 = arith.constant 0 : index
    %c0_0 = arith.constant 0 : index
    %0 = vector.load %arg1[%c0, %c0_0] : memref<64x256xf32, #tpu.memory_space<vmem>>, vector<64x256xf32>
    %c0_1 = arith.constant 0 : index
    %c0_2 = arith.constant 0 : index
    %1 = vector.load %arg2[%c0_1, %c0_2] : memref<256x512xf32, #tpu.memory_space<vmem>>, vector<256x512xf32>
    %cst = arith.constant dense<0.000000e+00> : vector<64x512xf32>
    %2 = tpu.matmul %0, %1, %cst {dimension_numbers = #tpu.dot_dimension_numbers<[1], [0], [0], [1], [0, 0, 1, 1], [], []>} : vector<64x256xf32>, vector<256x512xf32>, vector<64x512xf32> -> vector<64x512xf32>
    %c0_3 = arith.constant 0 : index
    %c0_4 = arith.constant 0 : index
    %3 = vector.load %arg3[%c0_3, %c0_4] : memref<1x512xf32, #tpu.memory_space<vmem>>, vector<1x512xf32>
    %4 = vector.broadcast %3 : vector<1x512xf32> to vector<64x512xf32>
    %5 = arith.addf %2, %4 : vector<64x512xf32>
    %cst_5 = arith.constant 0.000000e+00 : f32
    %6 = vector.broadcast %cst_5 : f32 to vector<64x512xf32>
    %7 = arith.maximumf %5, %6 : vector<64x512xf32>
    %c0_6 = arith.constant 0 : index
    %c0_7 = arith.constant 0 : index
    %8 = vector.load %arg4[%c0_6, %c0_7] : memref<512x128xf32, #tpu.memory_space<vmem>>, vector<512x128xf32>
    %cst_8 = arith.constant dense<0.000000e+00> : vector<64x128xf32>
    %9 = tpu.matmul %7, %8, %cst_8 {dimension_numbers = #tpu.dot_dimension_numbers<[1], [0], [0], [1], [0, 0, 1, 1], [], []>} : vector<64x512xf32>, vector<512x128xf32>, vector<64x128xf32> -> vector<64x128xf32>
    %c0_9 = arith.constant 0 : index
    %c0_10 = arith.constant 0 : index
    %10 = vector.load %arg5[%c0_9, %c0_10] : memref<1x128xf32, #tpu.memory_space<vmem>>, vector<1x128xf32>
    %11 = vector.broadcast %10 : vector<1x128xf32> to vector<64x128xf32>
    %12 = arith.addf %9, %11 : vector<64x128xf32>
    %c0_11 = arith.constant 0 : index
    %c0_12 = arith.constant 0 : index
    %13 = vector.load %arg6[%c0_11, %c0_12] : memref<64x128xf32, #tpu.memory_space<vmem>>, vector<64x128xf32>
    tpu.vector_store %arg6[%c0_11, %c0_12], %12 {strides = array<i32>} : memref<64x128xf32, #tpu.memory_space<vmem>>, vector<64x128xf32>,
    return
  }
  func.func @transform_0(%arg0: i32) -> (i32, i32) {
    %c0_i32 = arith.constant 0 : i32
    %c0_i32_0 = arith.constant 0 : i32
    return %arg0, %c0_i32 : i32, i32
  }
  func.func @transform_1(%arg0: i32) -> (i32, i32) {
    %c0_i32 = arith.constant 0 : i32
    %c0_i32_0 = arith.constant 0 : i32
    %c0_i32_1 = arith.constant 0 : i32
    return %c0_i32, %c0_i32_0 : i32, i32
  }
  func.func @transform_2(%arg0: i32) -> (i32, i32) {
    %c0_i32 = arith.constant 0 : i32
    %c0_i32_0 = arith.constant 0 : i32
    %c0_i32_1 = arith.constant 0 : i32
    return %c0_i32, %c0_i32_0 : i32, i32
  }
  func.func @transform_3(%arg0: i32) -> (i32, i32) {
    %c0_i32 = arith.constant 0 : i32
    %c0_i32_0 = arith.constant 0 : i32
    %c0_i32_1 = arith.constant 0 : i32
    return %c0_i32, %c0_i32_0 : i32, i32
  }
  func.func @transform_4(%arg0: i32) -> (i32, i32) {
    %c0_i32 = arith.constant 0 : i32
    %c0_i32_0 = arith.constant 0 : i32
    %c0_i32_1 = arith.constant 0 : i32
    return %c0_i32, %c0_i32_0 : i32, i32
  }
  func.func @transform_5(%arg0: i32) -> (i32, i32) {
    %c0_i32 = arith.constant 0 : i32
    %c0_i32_0 = arith.constant 0 : i32
    return %arg0, %c0_i32 : i32, i32
  }
}

</mosaic_0001>

<llo_original>
// kernel: tpu_custom_call.1
$region0: #{tpu_custom_call.1}
  #allocation0 [shape = 'u32[]', space=smem, size = 0x4, offset = 0x4, fixed_abs, tag = 'smem constant byte address 0x4 - core index']
  #allocation1 [shape = 'u32[144,128]{1,0:T(1,128)}', space=vmem, size = 0x12000, scoped, tag = 'internal scratch']
  %s0 = inlined_call_operand.hbm [shape: f32[64,256], index: 0, kind: input, shape index: {}]
  %s1 = inlined_call_operand.hbm [shape: f32[256,512], index: 1, kind: input, shape index: {}]
  %s2 = inlined_call_operand.vmem [shape: f32[1,512], index: 2, kind: input, shape index: {}]
  %s3 = inlined_call_operand.hbm [shape: f32[512,128], index: 3, kind: input, shape index: {}]
  %s4 = inlined_call_operand.vmem [shape: f32[1,128], index: 4, kind: input, shape index: {}]
  %s5 = inlined_call_operand.hbm [shape: f32[64,128], index: 5, kind: output, shape index: {}]
  %s6 = sld [smem:[#allocation0]]
  $region42: #{tpu_custom_call.1} parent=0
    _
  %s8 = ssub.s32 1, %s6
  %s9 = scalar_select 0, %s8, %s6
  $region1: #{tpu_custom_call.1} parent=0
    #allocation2 [shape = 'u8[65536]{0}', space=vmem, size = 0x10000, scoped, tag = 'input window, operand 0, single buffered']
    #allocation3 [shape = 's32[1]{0}', space=sflag, size = 0x4, scoped, tag = 'scoped memory for tpu_custom_call.1']
    #allocation4 [shape = 's32[1]{0}', space=sflag, size = 0x4, scoped, tag = 'scoped memory for tpu_custom_call.1']
    #allocation5 [shape = 'u8[524288]{0}', space=vmem, size = 0x80000, scoped, tag = 'input window, operand 1, single buffered']
    #allocation6 [shape = 's32[1]{0}', space=sflag, size = 0x4, scoped, tag = 'scoped memory for tpu_custom_call.1']
    #allocation7 [shape = 'u8[262144]{0}', space=vmem, size = 0x40000, scoped, tag = 'input window, operand 3, single buffered']
    #allocation8 [shape = 'u8[32768]{0}', space=vmem, size = 0x8000, scoped, tag = 'output window, operand 0, single buffered']
    %10 = vsyncpa [#allocation3], 0
    %11 = vsyncpa [#allocation6], 0
    %12 = vsyncpa [#allocation4], 0
    // Predicated region
    $region2: #{tpu_custom_call.1} parent=1 // pred_check
      _
    $region3: #{tpu_custom_call.1} parent=1 // pred_check_branch
      %14 = sbr.rel (0) target = $region5
    $region4: #{tpu_custom_call.1} parent=1 // pred_region
      %s16 = ssub.s32 2048, 2048
      %17 = vsyncadd [#allocation3], %s16
      %s18 = sshll.u32 [#allocation2], 4
      %s19 = int_to_ptr.vmem [resolvable:$true] %s18
      %24 = dma.hbm_to_vmem [thread:$0]  %s0, 2048, %s19, [#allocation3], 256, 256, 16
    $region5: #{tpu_custom_call.1} parent=1 // pred_fallthru
      _
    // Predicated region
    $region6: #{tpu_custom_call.1} parent=1 // pred_check
      _
    $region7: #{tpu_custom_call.1} parent=1 // pred_check_branch
      %26 = sbr.rel (0) target = $region9
    $region8: #{tpu_custom_call.1} parent=1 // pred_region
      %s28 = ssub.s32 16384, 16384
      %29 = vsyncadd [#allocation6], %s28
      %s30 = sshll.u32 [#allocation5], 4
      %s31 = int_to_ptr.vmem [resolvable:$true] %s30
      %36 = dma.hbm_to_vmem [thread:$0]  %s1, 16384, %s31, [#allocation6], 512, 512, 32
    $region9: #{tpu_custom_call.1} parent=1 // pred_fallthru
      _
    // Predicated region
    $region10: #{tpu_custom_call.1} parent=1 // pred_check
      _
    $region11: #{tpu_custom_call.1} parent=1 // pred_check_branch
      %38 = sbr.rel (0) target = $region13
    $region12: #{tpu_custom_call.1} parent=1 // pred_region
      _
    $region13: #{tpu_custom_call.1} parent=1 // pred_fallthru
      _
    // Predicated region
    $region14: #{tpu_custom_call.1} parent=1 // pred_check
      _
    $region15: #{tpu_custom_call.1} parent=1 // pred_check_branch
      %40 = sbr.rel (0) target = $region17
    $region16: #{tpu_custom_call.1} parent=1 // pred_region
      %s42 = ssub.s32 8192, 8192
      %43 = vsyncadd [#allocation6], %s42
      %s44 = sshll.u32 [#allocation7], 4
      %s45 = int_to_ptr.vmem [resolvable:$true] %s44
      %50 = dma.hbm_to_vmem [thread:$0]  %s3, 8192, %s45, [#allocation6], 128, 128, 8
    $region17: #{tpu_custom_call.1} parent=1 // pred_fallthru
      _
    // Predicated region
    $region18: #{tpu_custom_call.1} parent=1 // pred_check
      _
    $region19: #{tpu_custom_call.1} parent=1 // pred_check_branch
      %52 = sbr.rel (0) target = $region21
    $region20: #{tpu_custom_call.1} parent=1 // pred_region
      _
    $region21: #{tpu_custom_call.1} parent=1 // pred_fallthru
      _
    // Predicated region
    $region22: #{tpu_custom_call.1} parent=1 // pred_check
      _
    $region23: #{tpu_custom_call.1} parent=1 // pred_check_branch
      %54 = sbr.rel (0) target = $region25
    $region24: #{tpu_custom_call.1} parent=1 // pred_region
      %55 = dma.done [#allocation3], 2048
    $region25: #{tpu_custom_call.1} parent=1 // pred_fallthru
      _
    // Predicated region
    $region26: #{tpu_custom_call.1} parent=1 // pred_check
      _
    $region27: #{tpu_custom_call.1} parent=1 // pred_check_branch
      %57 = sbr.rel (0) target = $region29
    $region28: #{tpu_custom_call.1} parent=1 // pred_region
      %58 = dma.done [#allocation6], 16384
    $region29: #{tpu_custom_call.1} parent=1 // pred_fallthru
      _
    // Predicated region
    $region30: #{tpu_custom_call.1} parent=1 // pred_check
      _
    $region31: #{tpu_custom_call.1} parent=1 // pred_check_branch
      %60 = sbr.rel (0) target = $region33
    $region32: #{tpu_custom_call.1} parent=1 // pred_region
      %61 = dma.done [#allocation6], 8192
    $region33: #{tpu_custom_call.1} parent=1 // pred_fallthru
      _
    %v62 = vld [vmem:[#allocation2] sm:$0xff]
    %v63 = vld [vmem:[#allocation2 + $0x8] sm:$0xff]
    %v64 = vld [vmem:[#allocation2 + $0x10] sm:$0xff]
    %v65 = vld [vmem:[#allocation2 + $0x18] sm:$0xff]
    %v66 = vld [vmem:[#allocation2 + $0x20] sm:$0xff]
    %v67 = vld [vmem:[#allocation2 + $0x28] sm:$0xff]
    %v68 = vld [vmem:[#allocation2 + $0x30] sm:$0xff]
    %v69 = vld [vmem:[#allocation2 + $0x38] sm:$0xff]
    %v70 = vld [vmem:[#allocation2 + $0x40] sm:$0xff]
    %v71 = vld [vmem:[#allocation2 + $0x48] sm:$0xff]
    %v72 = vld [vmem:[#allocation2 + $0x50] sm:$0xff]
    %v73 = vld [vmem:[#allocation2 + $0x58] sm:$0xff]
    %v74 = vld [vmem:[#allocation2 + $0x60] sm:$0xff]
    %v75 = vld [vmem:[#allocation2 + $0x68] sm:$0xff]
    %v76 = vld [vmem:[#allocation2 + $0x70] sm:$0xff]
    %v77 = vld [vmem:[#allocation2 + $0x78] sm:$0xff]
    %v78 = vld [vmem:[#allocation5] sm:$0xff]
    %v79 = vld [vmem:[#allocation5 + $0x8] sm:$0xff]
    %v80 = vld [vmem:[#allocation5 + $0x10] sm:$0xff]
    %v81 = vld [vmem:[#allocation5 + $0x18] sm:$0xff]
    %v82 = vld [vmem:[#allocation5 + $0x20] sm:$0xff]
    %v83 = vld [vmem:[#allocation5 + $0x28] sm:$0xff]
    %v84 = vld [vmem:[#allocation5 + $0x30] sm:$0xff]
    %v85 = vld [vmem:[#allocation5 + $0x38] sm:$0xff]
    %v86 = vld [vmem:[#allocation5 + $0x40] sm:$0xff]
    %v87 = vld [vmem:[#allocation5 + $0x48] sm:$0xff]
    %v88 = vld [vmem:[#allocation5 + $0x50] sm:$0xff]
    %v89 = vld [vmem:[#allocation5 + $0x58] sm:$0xff]
    %v90 = vld [vmem:[#allocation5 + $0x60] sm:$0xff]
    %v91 = vld [vmem:[#allocation5 + $0x68] sm:$0xff]
    %v92 = vld [vmem:[#allocation5 + $0x70] sm:$0xff]
    %v93 = vld [vmem:[#allocation5 + $0x78] sm:$0xff]
    %v94 = vld [vmem:[#allocation5 + $0x80] sm:$0xff]
    %v95 = vld [vmem:[#allocation5 + $0x88] sm:$0xff]
    %v96 = vld [vmem:[#allocation5 + $0x90] sm:$0xff]
    %v97 = vld [vmem:[#allocation5 + $0x98] sm:$0xff]
    %v98 = vld [vmem:[#allocation5 + $0xa0] sm:$0xff]
    %v99 = vld [vmem:[#allocation5 + $0xa8] sm:$0xff]
    %v100 = vld [vmem:[#allocation5 + $0xb0] sm:$0xff]
    %v101 = vld [vmem:[#allocation5 + $0xb8] sm:$0xff]
    %v102 = vld [vmem:[#allocation5 + $0xc0] sm:$0xff]
    %v103 = vld [vmem:[#allocation5 + $0xc8] sm:$0xff]
    %v104 = vld [vmem:[#allocation5 + $0xd0] sm:$0xff]
    %v105 = vld [vmem:[#allocation5 + $0xd8] sm:$0xff]
    %v106 = vld [vmem:[#allocation5 + $0xe0] sm:$0xff]
    %v107 = vld [vmem:[#allocation5 + $0xe8] sm:$0xff]
    %v108 = vld [vmem:[#allocation5 + $0xf0] sm:$0xff]
    %v109 = vld [vmem:[#allocation5 + $0xf8] sm:$0xff]
    %v110 = vld [vmem:[#allocation5 + $0x100] sm:$0xff]
    %v111 = vld [vmem:[#allocation5 + $0x108] sm:$0xff]
    %v112 = vld [vmem:[#allocation5 + $0x110] sm:$0xff]
    %v113 = vld [vmem:[#allocation5 + $0x118] sm:$0xff]
    %v114 = vld [vmem:[#allocation5 + $0x120] sm:$0xff]
    %v115 = vld [vmem:[#allocation5 + $0x128] sm:$0xff]
    %v116 = vld [vmem:[#allocation5 + $0x130] sm:$0xff]
    %v117 = vld [vmem:[#allocation5 + $0x138] sm:$0xff]
    %v118 = vld [vmem:[#allocation5 + $0x140] sm:$0xff]
    %v119 = vld [vmem:[#allocation5 + $0x148] sm:$0xff]
    %v120 = vld [vmem:[#allocation5 + $0x150] sm:$0xff]
    %v121 = vld [vmem:[#allocation5 + $0x158] sm:$0xff]
    %v122 = vld [vmem:[#allocation5 + $0x160] sm:$0xff]
    %v123 = vld [vmem:[#allocation5 + $0x168] sm:$0xff]
    %v124 = vld [vmem:[#allocation5 + $0x170] sm:$0xff]
    %v125 = vld [vmem:[#allocation5 + $0x178] sm:$0xff]
    %v126 = vld [vmem:[#allocation5 + $0x180] sm:$0xff]
    %v127 = vld [vmem:[#allocation5 + $0x188] sm:$0xff]
    %v128 = vld [vmem:[#allocation5 + $0x190] sm:$0xff]
    %v129 = vld [vmem:[#allocation5 + $0x198] sm:$0xff]
    %v130 = vld [vmem:[#allocation5 + $0x1a0] sm:$0xff]
    %v131 = vld [vmem:[#allocation5 + $0x1a8] sm:$0xff]
    %v132 = vld [vmem:[#allocation5 + $0x1b0] sm:$0xff]
    %v133 = vld [vmem:[#allocation5 + $0x1b8] sm:$0xff]
    %v134 = vld [vmem:[#allocation5 + $0x1c0] sm:$0xff]
    %v135 = vld [vmem:[#allocation5 + $0x1c8] sm:$0xff]
    %v136 = vld [vmem:[#allocation5 + $0x1d0] sm:$0xff]
    %v137 = vld [vmem:[#allocation5 + $0x1d8] sm:$0xff]
    %v138 = vld [vmem:[#allocation5 + $0x1e0] sm:$0xff]
    %v139 = vld [vmem:[#allocation5 + $0x1e8] sm:$0xff]
    %v140 = vld [vmem:[#allocation5 + $0x1f0] sm:$0xff]
    %v141 = vld [vmem:[#allocation5 + $0x1f8] sm:$0xff]
    %v142 = vld [vmem:[#allocation5 + $0x200] sm:$0xff]
    %v143 = vld [vmem:[#allocation5 + $0x208] sm:$0xff]
    %v144 = vld [vmem:[#allocation5 + $0x210] sm:$0xff]
    %v145 = vld [vmem:[#allocation5 + $0x218] sm:$0xff]
    %v146 = vld [vmem:[#allocation5 + $0x220] sm:$0xff]
    %v147 = vld [vmem:[#allocation5 + $0x228] sm:$0xff]
    %v148 = vld [vmem:[#allocation5 + $0x230] sm:$0xff]
    %v149 = vld [vmem:[#allocation5 + $0x238] sm:$0xff]
    %v150 = vld [vmem:[#allocation5 + $0x240] sm:$0xff]
    %v151 = vld [vmem:[#allocation5 + $0x248] sm:$0xff]
    %v152 = vld [vmem:[#allocation5 + $0x250] sm:$0xff]
    %v153 = vld [vmem:[#allocation5 + $0x258] sm:$0xff]
    %v154 = vld [vmem:[#allocation5 + $0x260] sm:$0xff]
    %v155 = vld [vmem:[#allocation5 + $0x268] sm:$0xff]
    %v156 = vld [vmem:[#allocation5 + $0x270] sm:$0xff]
    %v157 = vld [vmem:[#allocation5 + $0x278] sm:$0xff]
    %v158 = vld [vmem:[#allocation5 + $0x280] sm:$0xff]
    %v159 = vld [vmem:[#allocation5 + $0x288] sm:$0xff]
    %v160 = vld [vmem:[#allocation5 + $0x290] sm:$0xff]
    %v161 = vld [vmem:[#allocation5 + $0x298] sm:$0xff]
    %v162 = vld [vmem:[#allocation5 + $0x2a0] sm:$0xff]
    %v163 = vld [vmem:[#allocation5 + $0x2a8] sm:$0xff]
    %v164 = vld [vmem:[#allocation5 + $0x2b0] sm:$0xff]
    %v165 = vld [vmem:[#allocation5 + $0x2b8] sm:$0xff]
    %v166 = vld [vmem:[#allocation5 + $0x2c0] sm:$0xff]
    %v167 = vld [vmem:[#allocation5 + $0x2c8] sm:$0xff]
    %v168 = vld [vmem:[#allocation5 + $0x2d0] sm:$0xff]
    %v169 = vld [vmem:[#allocation5 + $0x2d8] sm:$0xff]
    %v170 = vld [vmem:[#allocation5 + $0x2e0] sm:$0xff]
    %v171 = vld [vmem:[#allocation5 + $0x2e8] sm:$0xff]
    %v172 = vld [vmem:[#allocation5 + $0x2f0] sm:$0xff]
    %v173 = vld [vmem:[#allocation5 + $0x2f8] sm:$0xff]
    %v174 = vld [vmem:[#allocation5 + $0x300] sm:$0xff]
    %v175 = vld [vmem:[#allocation5 + $0x308] sm:$0xff]
    %v176 = vld [vmem:[#allocation5 + $0x310] sm:$0xff]
    %v177 = vld [vmem:[#allocation5 + $0x318] sm:$0xff]
    %v178 = vld [vmem:[#allocation5 + $0x320] sm:$0xff]
    %v179 = vld [vmem:[#allocation5 + $0x328] sm:$0xff]
    %v180 = vld [vmem:[#allocation5 + $0x330] sm:$0xff]
    %v181 = vld [vmem:[#allocation5 + $0x338] sm:$0xff]
    %v182 = vld [vmem:[#allocation5 + $0x340] sm:$0xff]
    %v183 = vld [vmem:[#allocation5 + $0x348] sm:$0xff]
    %v184 = vld [vmem:[#allocation5 + $0x350] sm:$0xff]
    %v185 = vld [vmem:[#allocation5 + $0x358] sm:$0xff]
    %v186 = vld [vmem:[#allocation5 + $0x360] sm:$0xff]
    %v187 = vld [vmem:[#allocation5 + $0x368] sm:$0xff]
    %v188 = vld [vmem:[#allocation5 + $0x370] sm:$0xff]
    %v189 = vld [vmem:[#allocation5 + $0x378] sm:$0xff]
    %v190 = vld [vmem:[#allocation5 + $0x380] sm:$0xff]
    %v191 = vld [vmem:[#allocation5 + $0x388] sm:$0xff]
    %v192 = vld [vmem:[#allocation5 + $0x390] sm:$0xff]
    %v193 = vld [vmem:[#allocation5 + $0x398] sm:$0xff]
    %v194 = vld [vmem:[#allocation5 + $0x3a0] sm:$0xff]
    %v195 = vld [vmem:[#allocation5 + $0x3a8] sm:$0xff]
    %v196 = vld [vmem:[#allocation5 + $0x3b0] sm:$0xff]
    %v197 = vld [vmem:[#allocation5 + $0x3b8] sm:$0xff]
    %v198 = vld [vmem:[#allocation5 + $0x3c0] sm:$0xff]
    %v199 = vld [vmem:[#allocation5 + $0x3c8] sm:$0xff]
    %v200 = vld [vmem:[#allocation5 + $0x3d0] sm:$0xff]
    %v201 = vld [vmem:[#allocation5 + $0x3d8] sm:$0xff]
    %v202 = vld [vmem:[#allocation5 + $0x3e0] sm:$0xff]
    %v203 = vld [vmem:[#allocation5 + $0x3e8] sm:$0xff]
    %v204 = vld [vmem:[#allocation5 + $0x3f0] sm:$0xff]
    %v205 = vld [vmem:[#allocation5 + $0x3f8] sm:$0xff]
    %v206 = vld [vmem:[%s2] sm:$0xf]
    %v208 = vlaneseq
    %v209 = vshrl.u32 %v208, 7
    %v210 = vsub.s32 0, %v209
    %v211 = vrot.slane %v206, %v210
    %v212 = vlaneseq
    %v213 = vshrl.u32 %v212, 7
    %v214 = vsub.s32 1, %v213
    %v215 = vrot.slane %v206, %v214
    %v216 = vlaneseq
    %v217 = vshrl.u32 %v216, 7
    %v218 = vsub.s32 2, %v217
    %v219 = vrot.slane %v206, %v218
    %v220 = vlaneseq
    %v221 = vshrl.u32 %v220, 7
    %v222 = vsub.s32 3, %v221
    %v223 = vrot.slane %v206, %v222
    %228 = vmatprep.subr.mxu0 %v79
    %229 = vmatpush1.msra.mxu0 %v78
    %230 = vmatprep.subr.mxu0 %v83
    %231 = vmatpush1.msra.mxu0 %v82
    %232 = vmatprep.subr.mxu0 %v87
    %233 = vmatpush1.msra.mxu0 %v86
    %234 = vmatprep.subr.mxu0 %v91
    %235 = vmatpush1.msra.mxu0 %v90
    %236 = vmatprep.subr.mxu0 %v95
    %237 = vmatpush1.msra.mxu0 %v94
    %238 = vmatprep.subr.mxu0 %v99
    %239 = vmatpush1.msra.mxu0 %v98
    %240 = vmatprep.subr.mxu0 %v103
    %241 = vmatpush1.msra.mxu0 %v102
    %242 = vmatprep.subr.mxu0 %v107
    %243 = vmatpush1.msra.mxu0 %v106
    %244 = vmatprep.subr.mxu0 %v111
    %245 = vmatpush1.msra.mxu0 %v110
    %246 = vmatprep.subr.mxu0 %v115
    %247 = vmatpush1.msra.mxu0 %v114
    %248 = vmatprep.subr.mxu0 %v119
    %249 = vmatpush1.msra.mxu0 %v118
    %250 = vmatprep.subr.mxu0 %v123
    %251 = vmatpush1.msra.mxu0 %v122
    %252 = vmatprep.subr.mxu0 %v127
    %253 = vmatpush1.msra.mxu0 %v126
    %254 = vmatprep.subr.mxu0 %v131
    %255 = vmatpush1.msra.mxu0 %v130
    %256 = vmatprep.subr.mxu0 %v135
    %257 = vmatpush1.msra.mxu0 %v134
    %258 = vmatprep.subr.mxu0 %v139
    %259 = vmatpush1.msra.mxu0 %v138
    %260 = vmatprep.subr.mxu0 %v143
    %261 = vmatpush1.msra.mxu0 %v142
    %262 = vmatprep.subr.mxu0 %v147
    %263 = vmatpush1.msra.mxu0 %v146
    %264 = vmatprep.subr.mxu0 %v151
    %265 = vmatpush1.msra.mxu0 %v150
    %266 = vmatprep.subr.mxu0 %v155
    %267 = vmatpush1.msra.mxu0 %v154
    %268 = vmatprep.subr.mxu0 %v159
    %269 = vmatpush1.msra.mxu0 %v158
    %270 = vmatprep.subr.mxu0 %v163
    %271 = vmatpush1.msra.mxu0 %v162
    %272 = vmatprep.subr.mxu0 %v167
    %273 = vmatpush1.msra.mxu0 %v166
    %274 = vmatprep.subr.mxu0 %v171
    %275 = vmatpush1.msra.mxu0 %v170
    %276 = vmatprep.subr.mxu0 %v175
    %277 = vmatpush1.msra.mxu0 %v174
    %278 = vmatprep.subr.mxu0 %v179
    %279 = vmatpush1.msra.mxu0 %v178
    %280 = vmatprep.subr.mxu0 %v183
    %281 = vmatpush1.msra.mxu0 %v182
    %282 = vmatprep.subr.mxu0 %v187
    %283 = vmatpush1.msra.mxu0 %v186
    %284 = vmatprep.subr.mxu0 %v191
    %285 = vmatpush1.msra.mxu0 %v190
    %286 = vmatprep.subr.mxu0 %v195
    %287 = vmatpush1.msra.mxu0 %v194
    %288 = vmatprep.subr.mxu0 %v199
    %289 = vmatpush1.msra.mxu0 %v198
    %290 = vmatprep.subr.mxu0 %v203
    %291 = vmatpush1.msra.mxu0 %v202
    %292 = vmatprep.mubr.f32.mxu0 %v63
    %293 = vmatmul.mubr.f32.gmra.mrb[0].mxu0 %v62
    %v294 = vpop.f32.mrb[0].mxu0
    %v295 = vadd.f32 %v211, %v294
    %v296 = vpop.f32.mrb[0].mxu0
    %v297 = vadd.f32 %v215, %v296
    %298 = vmatprep.mubr.f32.mxu0 %v65
    %299 = vmatmul.mubr.f32.gmra.mrb[0].mxu0 %v64
    %v300 = vpop.f32.mrb[0].mxu0
    %v301 = vadd.f32 %v211, %v300
    %v302 = vpop.f32.mrb[0].mxu0
    %v303 = vadd.f32 %v215, %v302
    %304 = vmatprep.mubr.f32.mxu0 %v67
    %305 = vmatmul.mubr.f32.gmra.mrb[0].mxu0 %v66
    %v306 = vpop.f32.mrb[0].mxu0
    %v307 = vadd.f32 %v211, %v306
    %v308 = vpop.f32.mrb[0].mxu0
    %v309 = vadd.f32 %v215, %v308
    %310 = vmatprep.mubr.f32.mxu0 %v69
    %311 = vmatmul.mubr.f32.gmra.mrb[0].mxu0 %v68
    %v312 = vpop.f32.mrb[0].mxu0
    %v313 = vadd.f32 %v211, %v312
    %v314 = vpop.f32.mrb[0].mxu0
    %v315 = vadd.f32 %v215, %v314
    %316 = vmatprep.mubr.f32.mxu0 %v71
    %317 = vmatmul.mubr.f32.gmra.mrb[0].mxu0 %v70
    %v318 = vpop.f32.mrb[0].mxu0
    %v319 = vadd.f32 %v211, %v318
    %v320 = vpop.f32.mrb[0].mxu0
    %v321 = vadd.f32 %v215, %v320
    %322 = vmatprep.mubr.f32.mxu0 %v73
    %323 = vmatmul.mubr.f32.gmra.mrb[0].mxu0 %v72
    %v324 = vpop.f32.mrb[0].mxu0
    %v325 = vadd.f32 %v211, %v324
    %v326 = vpop.f32.mrb[0].mxu0
    %v327 = vadd.f32 %v215, %v326
    %328 = vmatprep.mubr.f32.mxu0 %v75
    %329 = vmatmul.mubr.f32.gmra.mrb[0].mxu0 %v74
    %v330 = vpop.f32.mrb[0].mxu0
    %v331 = vadd.f32 %v211, %v330
    %v332 = vpop.f32.mrb[0].mxu0
    %v333 = vadd.f32 %v215, %v332
    %334 = vmatprep.mubr.f32.mxu0 %v77
    %335 = vmatmul.mubr.f32.gmra.mrb[0].mxu0 %v76
    %v336 = vpop.f32.mrb[0].mxu0
    %v337 = vadd.f32 %v211, %v336
    %v338 = vpop.f32.mrb[0].mxu0
    %v339 = vadd.f32 %v215, %v338
    %340 = vdwg.mxu0
    %341 = vmatprep.subr.mxu0 %v81
    %342 = vmatpush1.msra.mxu0 %v80
    %343 = vmatprep.subr.mxu0 %v85
    %344 = vmatpush1.msra.mxu0 %v84
    %345 = vmatprep.subr.mxu0 %v89
    %346 = vmatpush1.msra.mxu0 %v88
    %347 = vmatprep.subr.mxu0 %v93
    %348 = vmatpush1.msra.mxu0 %v92
    %349 = vmatprep.subr.mxu0 %v97
    %350 = vmatpush1.msra.mxu0 %v96
    %351 = vmatprep.subr.mxu0 %v101
    %352 = vmatpush1.msra.mxu0 %v100
    %353 = vmatprep.subr.mxu0 %v105
    %354 = vmatpush1.msra.mxu0 %v104
    %355 = vmatprep.subr.mxu0 %v109
    %356 = vmatpush1.msra.mxu0 %v108
    %357 = vmatprep.subr.mxu0 %v113
    %358 = vmatpush1.msra.mxu0 %v112
    %359 = vmatprep.subr.mxu0 %v117
    %360 = vmatpush1.msra.mxu0 %v116
    %361 = vmatprep.subr.mxu0 %v121
    %362 = vmatpush1.msra.mxu0 %v120
    %363 = vmatprep.subr.mxu0 %v125
    %364 = vmatpush1.msra.mxu0 %v124
    %365 = vmatprep.subr.mxu0 %v129
    %366 = vmatpush1.msra.mxu0 %v128
    %367 = vmatprep.subr.mxu0 %v133
    %368 = vmatpush1.msra.mxu0 %v132
    %369 = vmatprep.subr.mxu0 %v137
    %370 = vmatpush1.msra.mxu0 %v136
    %371 = vmatprep.subr.mxu0 %v141
    %372 = vmatpush1.msra.mxu0 %v140
    %373 = vmatprep.subr.mxu0 %v145
    %374 = vmatpush1.msra.mxu0 %v144
    %375 = vmatprep.subr.mxu0 %v149
    %376 = vmatpush1.msra.mxu0 %v148
    %377 = vmatprep.subr.mxu0 %v153
    %378 = vmatpush1.msra.mxu0 %v152
    %379 = vmatprep.subr.mxu0 %v157
    %380 = vmatpush1.msra.mxu0 %v156
    %381 = vmatprep.subr.mxu0 %v161
    %382 = vmatpush1.msra.mxu0 %v160
    %383 = vmatprep.subr.mxu0 %v165
    %384 = vmatpush1.msra.mxu0 %v164
    %385 = vmatprep.subr.mxu0 %v169
    %386 = vmatpush1.msra.mxu0 %v168
    %387 = vmatprep.subr.mxu0 %v173
    %388 = vmatpush1.msra.mxu0 %v172
    %389 = vmatprep.subr.mxu0 %v177
    %390 = vmatpush1.msra.mxu0 %v176
    %391 = vmatprep.subr.mxu0 %v181
    %392 = vmatpush1.msra.mxu0 %v180
    %393 = vmatprep.subr.mxu0 %v185
    %394 = vmatpush1.msra.mxu0 %v184
    %395 = vmatprep.subr.mxu0 %v189
    %396 = vmatpush1.msra.mxu0 %v188
    %397 = vmatprep.subr.mxu0 %v193
    %398 = vmatpush1.msra.mxu0 %v192
    %399 = vmatprep.subr.mxu0 %v197
    %400 = vmatpush1.msra.mxu0 %v196
    %401 = vmatprep.subr.mxu0 %v201
    %402 = vmatpush1.msra.mxu0 %v200
    %403 = vmatprep.subr.mxu0 %v205
    %404 = vmatpush1.msra.mxu0 %v204
    %405 = vmatprep.mubr.f32.mxu0 %v63
    %406 = vmatmul.mubr.f32.gmra.mrb[0].mxu0 %v62
    %v407 = vpop.f32.mrb[0].mxu0
    %v408 = vadd.f32 %v219, %v407
    %v409 = vpop.f32.mrb[0].mxu0
    %v410 = vadd.f32 %v223, %v409
    %411 = vmatprep.mubr.f32.mxu0 %v65
    %412 = vmatmul.mubr.f32.gmra.mrb[0].mxu0 %v64
    %v413 = vpop.f32.mrb[0].mxu0
    %v414 = vadd.f32 %v219, %v413
    %v415 = vpop.f32.mrb[0].mxu0
    %v416 = vadd.f32 %v223, %v415
    %417 = vmatprep.mubr.f32.mxu0 %v67
    %418 = vmatmul.mubr.f32.gmra.mrb[0].mxu0 %v66
    %v419 = vpop.f32.mrb[0].mxu0
    %v420 = vadd.f32 %v219, %v419
    %v421 = vpop.f32.mrb[0].mxu0
    %v422 = vadd.f32 %v223, %v421
    %423 = vmatprep.mubr.f32.mxu0 %v69
    %424 = vmatmul.mubr.f32.gmra.mrb[0].mxu0 %v68
    %v425 = vpop.f32.mrb[0].mxu0
    %v426 = vadd.f32 %v219, %v425
    %v427 = vpop.f32.mrb[0].mxu0
    %v428 = vadd.f32 %v223, %v427
    %429 = vmatprep.mubr.f32.mxu0 %v71
    %430 = vmatmul.mubr.f32.gmra.mrb[0].mxu0 %v70
    %v431 = vpop.f32.mrb[0].mxu0
    %v432 = vadd.f32 %v219, %v431
    %v433 = vpop.f32.mrb[0].mxu0
    %v434 = vadd.f32 %v223, %v433
    %435 = vmatprep.mubr.f32.mxu0 %v73
    %436 = vmatmul.mubr.f32.gmra.mrb[0].mxu0 %v72
    %v437 = vpop.f32.mrb[0].mxu0
    %v438 = vadd.f32 %v219, %v437
    %v439 = vpop.f32.mrb[0].mxu0
    %v440 = vadd.f32 %v223, %v439
    %441 = vmatprep.mubr.f32.mxu0 %v75
    %442 = vmatmul.mubr.f32.gmra.mrb[0].mxu0 %v74
    %v443 = vpop.f32.mrb[0].mxu0
    %v444 = vadd.f32 %v219, %v443
    %v445 = vpop.f32.mrb[0].mxu0
    %v446 = vadd.f32 %v223, %v445
    %447 = vmatprep.mubr.f32.mxu0 %v77
    %448 = vmatmul.mubr.f32.gmra.mrb[0].mxu0 %v76
    %v449 = vpop.f32.mrb[0].mxu0
    %v450 = vadd.f32 %v219, %v449
    %v451 = vpop.f32.mrb[0].mxu0
    %v452 = vadd.f32 %v223, %v451
    %453 = vdwg.mxu0
    %v454 = vmax.f32 %v295, 0.0
    %v455 = vmax.f32 %v297, 0.0
    %v456 = vmax.f32 %v408, 0.0
    %v457 = vmax.f32 %v410, 0.0
    %v458 = vmax.f32 %v301, 0.0
    %v459 = vmax.f32 %v303, 0.0
    %v460 = vmax.f32 %v414, 0.0
    %v461 = vmax.f32 %v416, 0.0
    %v462 = vmax.f32 %v307, 0.0
    %v463 = vmax.f32 %v309, 0.0
    %v464 = vmax.f32 %v420, 0.0
    %v465 = vmax.f32 %v422, 0.0
    %v466 = vmax.f32 %v313, 0.0
    %v467 = vmax.f32 %v315, 0.0
    %v468 = vmax.f32 %v426, 0.0
    %v469 = vmax.f32 %v428, 0.0
    %v470 = vmax.f32 %v319, 0.0
    %v471 = vmax.f32 %v321, 0.0
    %v472 = vmax.f32 %v432, 0.0
    %v473 = vmax.f32 %v434, 0.0
    %v474 = vmax.f32 %v325, 0.0
    %v475 = vmax.f32 %v327, 0.0
    %v476 = vmax.f32 %v438, 0.0
    %v477 = vmax.f32 %v440, 0.0
    %v478 = vmax.f32 %v331, 0.0
    %v479 = vmax.f32 %v333, 0.0
    %v480 = vmax.f32 %v444, 0.0
    %v481 = vmax.f32 %v446, 0.0
    %v482 = vmax.f32 %v337, 0.0
    %v483 = vmax.f32 %v339, 0.0
    %v484 = vmax.f32 %v450, 0.0
    %v485 = vmax.f32 %v452, 0.0
    %v486 = vld [vmem:[#allocation7] sm:$0xff]
    %v487 = vld [vmem:[#allocation7 + $0x8] sm:$0xff]
    %v488 = vld [vmem:[#allocation7 + $0x10] sm:$0xff]
    %v489 = vld [vmem:[#allocation7 + $0x18] sm:$0xff]
    %v490 = vld [vmem:[#allocation7 + $0x20] sm:$0xff]
    %v491 = vld [vmem:[#allocation7 + $0x28] sm:$0xff]
    %v492 = vld [vmem:[#allocation7 + $0x30] sm:$0xff]
    %v493 = vld [vmem:[#allocation7 + $0x38] sm:$0xff]
    %v494 = vld [vmem:[#allocation7 + $0x40] sm:$0xff]
    %v495 = vld [vmem:[#allocation7 + $0x48] sm:$0xff]
    %v496 = vld [vmem:[#allocation7 + $0x50] sm:$0xff]
    %v497 = vld [vmem:[#allocation7 + $0x58] sm:$0xff]
    %v498 = vld [vmem:[#allocation7 + $0x60] sm:$0xff]
    %v499 = vld [vmem:[#allocation7 + $0x68] sm:$0xff]
    %v500 = vld [vmem:[#allocation7 + $0x70] sm:$0xff]
    %v501 = vld [vmem:[#allocation7 + $0x78] sm:$0xff]
    %v502 = vld [vmem:[#allocation7 + $0x80] sm:$0xff]
    %v503 = vld [vmem:[#allocation7 + $0x88] sm:$0xff]
    %v504 = vld [vmem:[#allocation7 + $0x90] sm:$0xff]
    %v505 = vld [vmem:[#allocation7 + $0x98] sm:$0xff]
    %v506 = vld [vmem:[#allocation7 + $0xa0] sm:$0xff]
    %v507 = vld [vmem:[#allocation7 + $0xa8] sm:$0xff]
    %v508 = vld [vmem:[#allocation7 + $0xb0] sm:$0xff]
    %v509 = vld [vmem:[#allocation7 + $0xb8] sm:$0xff]
    %v510 = vld [vmem:[#allocation7 + $0xc0] sm:$0xff]
    %v511 = vld [vmem:[#allocation7 + $0xc8] sm:$0xff]
    %v512 = vld [vmem:[#allocation7 + $0xd0] sm:$0xff]
    %v513 = vld [vmem:[#allocation7 + $0xd8] sm:$0xff]
    %v514 = vld [vmem:[#allocation7 + $0xe0] sm:$0xff]
    %v515 = vld [vmem:[#allocation7 + $0xe8] sm:$0xff]
    %v516 = vld [vmem:[#allocation7 + $0xf0] sm:$0xff]
    %v517 = vld [vmem:[#allocation7 + $0xf8] sm:$0xff]
    %v518 = vld [vmem:[#allocation7 + $0x100] sm:$0xff]
    %v519 = vld [vmem:[#allocation7 + $0x108] sm:$0xff]
    %v520 = vld [vmem:[#allocation7 + $0x110] sm:$0xff]
    %v521 = vld [vmem:[#allocation7 + $0x118] sm:$0xff]
    %v522 = vld [vmem:[#allocation7 + $0x120] sm:$0xff]
    %v523 = vld [vmem:[#allocation7 + $0x128] sm:$0xff]
    %v524 = vld [vmem:[#allocation7 + $0x130] sm:$0xff]
    %v525 = vld [vmem:[#allocation7 + $0x138] sm:$0xff]
    %v526 = vld [vmem:[#allocation7 + $0x140] sm:$0xff]
    %v527 = vld [vmem:[#allocation7 + $0x148] sm:$0xff]
    %v528 = vld [vmem:[#allocation7 + $0x150] sm:$0xff]
    %v529 = vld [vmem:[#allocation7 + $0x158] sm:$0xff]
    %v530 = vld [vmem:[#allocation7 + $0x160] sm:$0xff]
    %v531 = vld [vmem:[#allocation7 + $0x168] sm:$0xff]
    %v532 = vld [vmem:[#allocation7 + $0x170] sm:$0xff]
    %v533 = vld [vmem:[#allocation7 + $0x178] sm:$0xff]
    %v534 = vld [vmem:[#allocation7 + $0x180] sm:$0xff]
    %v535 = vld [vmem:[#allocation7 + $0x188] sm:$0xff]
    %v536 = vld [vmem:[#allocation7 + $0x190] sm:$0xff]
    %v537 = vld [vmem:[#allocation7 + $0x198] sm:$0xff]
    %v538 = vld [vmem:[#allocation7 + $0x1a0] sm:$0xff]
    %v539 = vld [vmem:[#allocation7 + $0x1a8] sm:$0xff]
    %v540 = vld [vmem:[#allocation7 + $0x1b0] sm:$0xff]
    %v541 = vld [vmem:[#allocation7 + $0x1b8] sm:$0xff]
    %v542 = vld [vmem:[#allocation7 + $0x1c0] sm:$0xff]
    %v543 = vld [vmem:[#allocation7 + $0x1c8] sm:$0xff]
    %v544 = vld [vmem:[#allocation7 + $0x1d0] sm:$0xff]
    %v545 = vld [vmem:[#allocation7 + $0x1d8] sm:$0xff]
    %v546 = vld [vmem:[#allocation7 + $0x1e0] sm:$0xff]
    %v547 = vld [vmem:[#allocation7 + $0x1e8] sm:$0xff]
    %v548 = vld [vmem:[#allocation7 + $0x1f0] sm:$0xff]
    %v549 = vld [vmem:[#allocation7 + $0x1f8] sm:$0xff]
    %v550 = vld [vmem:[%s4] sm:$0x1]
    %v552 = vlaneseq
    %v553 = vshrl.u32 %v552, 7
    %v554 = vsub.s32 0, %v553
    %v555 = vrot.slane %v550, %v554
    %557 = vmatprep.subr.mxu0 0.0
    %558 = vmatpush1.msra.mxu0 %v486
    %559 = vmatprep.subr.mxu0 0.0
    %560 = vmatpush1.msra.mxu0 %v487
    %561 = vmatprep.subr.mxu0 0.0
    %562 = vmatpush1.msra.mxu0 %v488
    %563 = vmatprep.subr.mxu0 0.0
    %564 = vmatpush1.msra.mxu0 %v489
    %565 = vmatprep.subr.mxu0 0.0
    %566 = vmatpush1.msra.mxu0 %v490
    %567 = vmatprep.subr.mxu0 0.0
    %568 = vmatpush1.msra.mxu0 %v491
    %569 = vmatprep.subr.mxu0 0.0
    %570 = vmatpush1.msra.mxu0 %v492
    %571 = vmatprep.subr.mxu0 0.0
    %572 = vmatpush1.msra.mxu0 %v493
    %573 = vmatprep.subr.mxu0 0.0
    %574 = vmatpush1.msra.mxu0 %v494
    %575 = vmatprep.subr.mxu0 0.0
    %576 = vmatpush1.msra.mxu0 %v495
    %577 = vmatprep.subr.mxu0 0.0
    %578 = vmatpush1.msra.mxu0 %v496
    %579 = vmatprep.subr.mxu0 0.0
    %580 = vmatpush1.msra.mxu0 %v497
    %581 = vmatprep.subr.mxu0 0.0
    %582 = vmatpush1.msra.mxu0 %v498
    %583 = vmatprep.subr.mxu0 0.0
    %584 = vmatpush1.msra.mxu0 %v499
    %585 = vmatprep.subr.mxu0 0.0
    %586 = vmatpush1.msra.mxu0 %v500
    %587 = vmatprep.subr.mxu0 0.0
    %588 = vmatpush1.msra.mxu0 %v501
    %589 = vmatprep.subr.mxu0 0.0
    %590 = vmatpush1.msra.mxu0 %v502
    %591 = vmatprep.subr.mxu0 0.0
    %592 = vmatpush1.msra.mxu0 %v503
    %593 = vmatprep.subr.mxu0 0.0
    %594 = vmatpush1.msra.mxu0 %v504
    %595 = vmatprep.subr.mxu0 0.0
    %596 = vmatpush1.msra.mxu0 %v505
    %597 = vmatprep.subr.mxu0 0.0
    %598 = vmatpush1.msra.mxu0 %v506
    %599 = vmatprep.subr.mxu0 0.0
    %600 = vmatpush1.msra.mxu0 %v507
    %601 = vmatprep.subr.mxu0 0.0
    %602 = vmatpush1.msra.mxu0 %v508
    %603 = vmatprep.subr.mxu0 0.0
    %604 = vmatpush1.msra.mxu0 %v509
    %605 = vmatprep.subr.mxu0 0.0
    %606 = vmatpush1.msra.mxu0 %v510
    %607 = vmatprep.subr.mxu0 0.0
    %608 = vmatpush1.msra.mxu0 %v511
    %609 = vmatprep.subr.mxu0 0.0
    %610 = vmatpush1.msra.mxu0 %v512
    %611 = vmatprep.subr.mxu0 0.0
    %612 = vmatpush1.msra.mxu0 %v513
    %613 = vmatprep.subr.mxu0 0.0
    %614 = vmatpush1.msra.mxu0 %v514
    %615 = vmatprep.subr.mxu0 0.0
    %616 = vmatpush1.msra.mxu0 %v515
    %617 = vmatprep.subr.mxu0 0.0
    %618 = vmatpush1.msra.mxu0 %v516
    %619 = vmatprep.subr.mxu0 0.0
    %620 = vmatpush1.msra.mxu0 %v517
    %621 = vmatprep.mubr.f32.mxu0 %v455
    %622 = vmatmul.mubr.f32.gmra.mrb[0].mxu0 %v454
    %v623 = vpop.f32.mrb[0].mxu0
    %v624 = vadd.f32 %v555, %v623
    %v625 = vpop.f32.mrb[0].mxu0
    %626 = vmatprep.mubr.f32.mxu0 %v459
    %627 = vmatmul.mubr.f32.gmra.mrb[0].mxu0 %v458
    %v628 = vpop.f32.mrb[0].mxu0
    %v629 = vadd.f32 %v555, %v628
    %v630 = vpop.f32.mrb[0].mxu0
    %631 = vmatprep.mubr.f32.mxu0 %v463
    %632 = vmatmul.mubr.f32.gmra.mrb[0].mxu0 %v462
    %v633 = vpop.f32.mrb[0].mxu0
    %v634 = vadd.f32 %v555, %v633
    %v635 = vpop.f32.mrb[0].mxu0
    %636 = vmatprep.mubr.f32.mxu0 %v467
    %637 = vmatmul.mubr.f32.gmra.mrb[0].mxu0 %v466
    %v638 = vpop.f32.mrb[0].mxu0
    %v639 = vadd.f32 %v555, %v638
    %v640 = vpop.f32.mrb[0].mxu0
    %641 = vmatprep.mubr.f32.mxu0 %v471
    %642 = vmatmul.mubr.f32.gmra.mrb[0].mxu0 %v470
    %v643 = vpop.f32.mrb[0].mxu0
    %v644 = vadd.f32 %v555, %v643
    %v645 = vpop.f32.mrb[0].mxu0
    %646 = vmatprep.mubr.f32.mxu0 %v475
    %647 = vmatmul.mubr.f32.gmra.mrb[0].mxu0 %v474
    %v648 = vpop.f32.mrb[0].mxu0
    %v649 = vadd.f32 %v555, %v648
    %v650 = vpop.f32.mrb[0].mxu0
    %651 = vmatprep.mubr.f32.mxu0 %v479
    %652 = vmatmul.mubr.f32.gmra.mrb[0].mxu0 %v478
    %v653 = vpop.f32.mrb[0].mxu0
    %v654 = vadd.f32 %v555, %v653
    %v655 = vpop.f32.mrb[0].mxu0
    %656 = vmatprep.mubr.f32.mxu0 %v483
    %657 = vmatmul.mubr.f32.gmra.mrb[0].mxu0 %v482
    %v658 = vpop.f32.mrb[0].mxu0
    %v659 = vadd.f32 %v555, %v658
    %v660 = vpop.f32.mrb[0].mxu0
    %661 = vdwg.mxu0
    %662 = vmatprep.subr.mxu0 0.0
    %663 = vmatpush1.msra.mxu0 %v518
    %664 = vmatprep.subr.mxu0 0.0
    %665 = vmatpush1.msra.mxu0 %v519
    %666 = vmatprep.subr.mxu0 0.0
    %667 = vmatpush1.msra.mxu0 %v520
    %668 = vmatprep.subr.mxu0 0.0
    %669 = vmatpush1.msra.mxu0 %v521
    %670 = vmatprep.subr.mxu0 0.0
    %671 = vmatpush1.msra.mxu0 %v522
    %672 = vmatprep.subr.mxu0 0.0
    %673 = vmatpush1.msra.mxu0 %v523
    %674 = vmatprep.subr.mxu0 0.0
    %675 = vmatpush1.msra.mxu0 %v524
    %676 = vmatprep.subr.mxu0 0.0
    %677 = vmatpush1.msra.mxu0 %v525
    %678 = vmatprep.subr.mxu0 0.0
    %679 = vmatpush1.msra.mxu0 %v526
    %680 = vmatprep.subr.mxu0 0.0
    %681 = vmatpush1.msra.mxu0 %v527
    %682 = vmatprep.subr.mxu0 0.0
    %683 = vmatpush1.msra.mxu0 %v528
    %684 = vmatprep.subr.mxu0 0.0
    %685 = vmatpush1.msra.mxu0 %v529
    %686 = vmatprep.subr.mxu0 0.0
    %687 = vmatpush1.msra.mxu0 %v530
    %688 = vmatprep.subr.mxu0 0.0
    %689 = vmatpush1.msra.mxu0 %v531
    %690 = vmatprep.subr.mxu0 0.0
    %691 = vmatpush1.msra.mxu0 %v532
    %692 = vmatprep.subr.mxu0 0.0
    %693 = vmatpush1.msra.mxu0 %v533
    %694 = vmatprep.subr.mxu0 0.0
    %695 = vmatpush1.msra.mxu0 %v534
    %696 = vmatprep.subr.mxu0 0.0
    %697 = vmatpush1.msra.mxu0 %v535
    %698 = vmatprep.subr.mxu0 0.0
    %699 = vmatpush1.msra.mxu0 %v536
    %700 = vmatprep.subr.mxu0 0.0
    %701 = vmatpush1.msra.mxu0 %v537
    %702 = vmatprep.subr.mxu0 0.0
    %703 = vmatpush1.msra.mxu0 %v538
    %704 = vmatprep.subr.mxu0 0.0
    %705 = vmatpush1.msra.mxu0 %v539
    %706 = vmatprep.subr.mxu0 0.0
    %707 = vmatpush1.msra.mxu0 %v540
    %708 = vmatprep.subr.mxu0 0.0
    %709 = vmatpush1.msra.mxu0 %v541
    %710 = vmatprep.subr.mxu0 0.0
    %711 = vmatpush1.msra.mxu0 %v542
    %712 = vmatprep.subr.mxu0 0.0
    %713 = vmatpush1.msra.mxu0 %v543
    %714 = vmatprep.subr.mxu0 0.0
    %715 = vmatpush1.msra.mxu0 %v544
    %716 = vmatprep.subr.mxu0 0.0
    %717 = vmatpush1.msra.mxu0 %v545
    %718 = vmatprep.subr.mxu0 0.0
    %719 = vmatpush1.msra.mxu0 %v546
    %720 = vmatprep.subr.mxu0 0.0
    %721 = vmatpush1.msra.mxu0 %v547
    %722 = vmatprep.subr.mxu0 0.0
    %723 = vmatpush1.msra.mxu0 %v548
    %724 = vmatprep.subr.mxu0 0.0
    %725 = vmatpush1.msra.mxu0 %v549
    %726 = vmatprep.mubr.f32.mxu0 %v457
    %727 = vmatmul.mubr.f32.gmra.mrb[0].mxu0 %v456
    %v728 = vpop.f32.mrb[0].mxu0
    %v729 = vadd.f32 %v624, %v728
    %v730 = vpop.f32.mrb[0].mxu0
    %731 = vmatprep.mubr.f32.mxu0 %v461
    %732 = vmatmul.mubr.f32.gmra.mrb[0].mxu0 %v460
    %v733 = vpop.f32.mrb[0].mxu0
    %v734 = vadd.f32 %v629, %v733
    %v735 = vpop.f32.mrb[0].mxu0
    %736 = vmatprep.mubr.f32.mxu0 %v465
    %737 = vmatmul.mubr.f32.gmra.mrb[0].mxu0 %v464
    %v738 = vpop.f32.mrb[0].mxu0
    %v739 = vadd.f32 %v634, %v738
    %v740 = vpop.f32.mrb[0].mxu0
    %741 = vmatprep.mubr.f32.mxu0 %v469
    %742 = vmatmul.mubr.f32.gmra.mrb[0].mxu0 %v468
    %v743 = vpop.f32.mrb[0].mxu0
    %v744 = vadd.f32 %v639, %v743
    %v745 = vpop.f32.mrb[0].mxu0
    %746 = vmatprep.mubr.f32.mxu0 %v473
    %747 = vmatmul.mubr.f32.gmra.mrb[0].mxu0 %v472
    %v748 = vpop.f32.mrb[0].mxu0
    %v749 = vadd.f32 %v644, %v748
    %v750 = vpop.f32.mrb[0].mxu0
    %751 = vmatprep.mubr.f32.mxu0 %v477
    %752 = vmatmul.mubr.f32.gmra.mrb[0].mxu0 %v476
    %v753 = vpop.f32.mrb[0].mxu0
    %v754 = vadd.f32 %v649, %v753
    %v755 = vpop.f32.mrb[0].mxu0
    %756 = vmatprep.mubr.f32.mxu0 %v481
    %757 = vmatmul.mubr.f32.gmra.mrb[0].mxu0 %v480
    %v758 = vpop.f32.mrb[0].mxu0
    %v759 = vadd.f32 %v654, %v758
    %v760 = vpop.f32.mrb[0].mxu0
    %761 = vmatprep.mubr.f32.mxu0 %v485
    %762 = vmatmul.mubr.f32.gmra.mrb[0].mxu0 %v484
    %v763 = vpop.f32.mrb[0].mxu0
    %v764 = vadd.f32 %v659, %v763
    %v765 = vpop.f32.mrb[0].mxu0
    %766 = vdwg.mxu0
    %767 = vst [vmem:[#allocation8] sm:$0xff] %v729
    %768 = vst [vmem:[#allocation8 + $0x8] sm:$0xff] %v734
    %769 = vst [vmem:[#allocation8 + $0x10] sm:$0xff] %v739
    %770 = vst [vmem:[#allocation8 + $0x18] sm:$0xff] %v744
    %771 = vst [vmem:[#allocation8 + $0x20] sm:$0xff] %v749
    %772 = vst [vmem:[#allocation8 + $0x28] sm:$0xff] %v754
    %773 = vst [vmem:[#allocation8 + $0x30] sm:$0xff] %v759
    %774 = vst [vmem:[#allocation8 + $0x38] sm:$0xff] %v764
    // Predicated region
    $region34: #{tpu_custom_call.1} parent=1 // pred_check
      _
    $region35: #{tpu_custom_call.1} parent=1 // pred_check_branch
      %776 = sbr.rel (0) target = $region37
    $region36: #{tpu_custom_call.1} parent=1 // pred_region
      %s778 = ssub.s32 1024, 1024
      %779 = vsyncadd [#allocation4], %s778
      %s780 = sshll.u32 [#allocation8], 4
      %s781 = int_to_ptr.vmem [resolvable:$true] %s780
      %786 = dma.vmem_to_hbm [thread:$0]  %s781, 1024, %s5, [#allocation4], 128, 128, 8
    $region37: #{tpu_custom_call.1} parent=1 // pred_fallthru
      _
    // Predicated region
    $region38: #{tpu_custom_call.1} parent=1 // pred_check
      _
    $region39: #{tpu_custom_call.1} parent=1 // pred_check_branch
      %788 = sbr.rel (0) target = $region41
    $region40: #{tpu_custom_call.1} parent=1 // pred_region
      %789 = dma.done [#allocation4], 1024
    $region41: #{tpu_custom_call.1} parent=1 // pred_fallthru
      _
    %790 = vsyncpa [#allocation3], 1
    %791 = vsyncpa [#allocation6], 1
    %792 = vsyncpa [#allocation4], 1

</llo_original>
